<compile_context>
chip_gen: v6e
topology: v6e:2x2x1
jax: 0.10.0
libtpu: 0.0.40
codegen_flags: <defaults>
</compile_context>

<pallas_src>
import functools

import jax
import jax.numpy as jnp
from jax import lax
from jax.experimental import pallas as pl
from jax.experimental.pallas import tpu as pltpu


def _round_up(x, m):
    return ((x + m - 1) // m) * m


def _ovabce_kernel(logits_ref, inds_ref, part_ref, *, n_rows):
    i = pl.program_id(0)
    j = pl.program_id(1)

    x = logits_ref[...].astype(jnp.float32)               # (tn, tc), math in f32
    tn, tc = x.shape
    inds = inds_ref[...]                                   # (tn, K) int32
    kdim = inds.shape[1]

    # Fold the column-tile offset into the tiny index table (cheaper than
    # offsetting the (tn, tc) iota).
    ishift = inds - j * tc                                  # (tn, K)

    # One-hot "scatter(1, inds, 1)" with the C-th ("null") column dropped:
    # valid column ids only reach C-1, so index == C never lands in a stored
    # (in-bounds) output column.
    col = lax.broadcasted_iota(jnp.int32, (tn, tc), 1)
    tgt = col == ishift[:, 0:1]
    for k in range(1, kdim):                                # K is small & static
        tgt = jnp.logical_or(tgt, col == ishift[:, k:k + 1])

    # Numerically-stable BCE-with-logits element: softplus(x) - x*z,
    # with the x*z term as a select (no bool->f32 convert, no multiply).
    sp = jnp.maximum(x, 0.0) + jnp.log1p(jnp.exp(-jnp.abs(x)))
    elem = sp - jnp.where(tgt, x, 0.0)

    # Per-tile partial sum over rows only (cheap sublane reduce); the final
    # lane reduction + division happen once in the wrapper.
    part_ref[...] = jnp.sum(elem, axis=0, keepdims=True)   # (1, tc)

    # Tail-row validity mask: only the last row tile pays for it (and only
    # when N is not a multiple of tile_n).  Column raggedness needs no mask:
    # out-of-range column sums are dropped by the masked output store.
    if n_rows % tn != 0:
        @pl.when(i == pl.num_programs(0) - 1)
        def _():
            row = lax.broadcasted_iota(jnp.int32, (tn, 1), 0) + i * tn
            masked = jnp.where(row < n_rows, elem, 0.0)
            part_ref[...] = jnp.sum(masked, axis=0, keepdims=True)


def ovabce_loss(logits, inds, *, tile_n=None, tile_c=None):
    """BCEWithLogitsLoss(reduction='mean') against scatter-built one-hot targets.

    logits : (N, C) float32 or bfloat16 model outputs.
    inds   : (N, K) integer scatter indices in [0, C] (index == C is the dropped null class).
    """
    N, C = logits.shape
    _, K = inds.shape
    itemsize = jnp.dtype(logits.dtype).itemsize
    row_align = 16 if itemsize == 2 else 8                 # bf16 packs 16 rows/vreg group
    c_pad = _round_up(C, 128)

    # ---- tile sizing derived from a VMEM budget (conservative for v7x 64 MiB) ----
    VMEM_BUDGET = 44 << 20
    SLACK = 4 << 20
    N_TMP = 4                                              # f32 elementwise temporaries per block
    bytes_per_elem = 2 * itemsize + N_TMP * 4              # double-buffered input + temps
    e_target = (VMEM_BUDGET - SLACK) // bytes_per_elem     # target elements per logits block

    if tile_c is None:
        if e_target >= row_align * c_pad:
            tile_c = C                                     # no column tiling needed
        else:
            tile_c = max(128, ((e_target // row_align) // 128) * 128)
    tile_c = int(tile_c)
    if tile_c >= C:
        tile_c = C                                         # full-width block (always legal)
    else:
        tile_c = max(128, (tile_c // 128) * 128)           # lane-aligned partial blocks
    tc_pad = _round_up(tile_c, 128)

    if tile_n is None:
        tile_n = e_target // max(1, tc_pad)
    tile_n = int(tile_n)
    tile_n = min(tile_n, _round_up(N, row_align))
    tile_n = max(row_align, (tile_n // row_align) * row_align)

    num_tiles_n = pl.cdiv(N, tile_n)
    num_tiles_c = pl.cdiv(C, tile_c)
    n_pad = num_tiles_n * tile_n

    # Pad the (tiny) index table so its per-tile DMA stays in bounds; padded
    # rows get -1 which never matches any column (and are masked anyway).
    inds_p = inds.astype(jnp.int32)
    if n_pad != N:
        pad = jnp.full((n_pad - N, K), -1, dtype=jnp.int32)
        inds_p = jnp.concatenate([inds_p, pad], axis=0)

    # VMEM estimate for the chosen tiles (this is what the budget above sized).
    vmem_est = (2 * tile_n * tc_pad * itemsize             # double-buffered logits blocks
                + N_TMP * tile_n * tc_pad * 4               # f32 temporaries (x, iota, mask, elem)
                + 2 * tile_n * _round_up(K, 128) * 4        # double-buffered inds blocks
                + 2 * 8 * tc_pad * 4                        # double-buffered (sublane-padded) output
                + SLACK)
    vmem_limit = int(min(max(vmem_est, 16 << 20), 60 << 20))

    kernel = functools.partial(_ovabce_kernel, n_rows=N)
    partials = pl.pallas_call(
        kernel,
        out_shape=jax.ShapeDtypeStruct((num_tiles_n, C), jnp.float32),
        grid_spec=pltpu.PrefetchScalarGridSpec(
            num_scalar_prefetch=0,
            grid=(num_tiles_n, num_tiles_c),
            in_specs=[
                pl.BlockSpec((tile_n, tile_c), lambda i, j: (i, j)),
                pl.BlockSpec((tile_n, K), lambda i, j: (i, 0)),
            ],
            out_specs=pl.BlockSpec((1, tile_c), lambda i, j: (i, j)),
        ),
        compiler_params=pltpu.CompilerParams(
            dimension_semantics=("parallel", "parallel"),   # independent lane-dense tiles
            vmem_limit_bytes=vmem_limit,
        ),
    )(logits, inds_p)

    return jnp.sum(partials) / jnp.float32(N * C)           # reduction='mean'


def _reference_loss(logits, inds):
    """Pure-JAX reference of the PyTorch forward (BCEWithLogitsLoss, mean)."""
    N, C = logits.shape
    targets = jnp.zeros((N, C + 1), jnp.float32)
    targets = targets.at[jnp.arange(N)[:, None], inds].set(1.0)[:, :-1]
    x = logits.astype(jnp.float32)
    elem = jnp.maximum(x, 0.0) - x * targets + jnp.log1p(jnp.exp(-jnp.abs(x)))
    return jnp.mean(elem)


if __name__ == "__main__":
    key = jax.random.PRNGKey(0)
    k1, k2, k3, k4 = jax.random.split(key, 4)

    # Small synthetic shapes consistent with the module: batch=24, classes=128, 2 labels/row.
    N, C, K = 24, 128, 2
    logits = jax.random.normal(k1, (N, C), dtype=jnp.float32)        # stands in for model(b)
    inds = jax.random.randint(k2, (N, K), 0, C + 1, dtype=jnp.int32)  # index == C is the dropped null class

    ref = _reference_loss(logits, inds)

    # 1) Default auto tiling (single block here).
    loss = jax.block_until_ready(ovabce_loss(logits, inds))
    assert jnp.allclose(loss, ref, atol=1e-5, rtol=1e-5), (loss, ref)

    # 2) Multi-tile rows with a ragged tail (24 rows, 16-row tiles): exercises
    #    the cdiv grid + last-tile-only row mask.
    loss2 = jax.block_until_ready(ovabce_loss(logits, inds, tile_n=16))
    assert jnp.allclose(loss2, ref, atol=1e-5, rtol=1e-5), (loss2, ref)

    # 3) bf16 logits (halved HBM traffic); math stays f32 inside the kernel.
    logits_bf16 = logits.astype(jnp.bfloat16)
    ref_bf16 = _reference_loss(logits_bf16.astype(jnp.float32), inds)
    loss3 = jax.block_until_ready(ovabce_loss(logits_bf16, inds))
    assert jnp.allclose(loss3, ref_bf16, atol=1e-5, rtol=1e-5), (loss3, ref_bf16)

    # 4) 2-D (row x column) tiling with ragged rows AND ragged columns.
    N2, C2 = 24, 300
    logits2 = jax.random.normal(k3, (N2, C2), dtype=jnp.float32)
    inds2 = jax.random.randint(k4, (N2, K), 0, C2 + 1, dtype=jnp.int32)
    ref2 = _reference_loss(logits2, inds2)
    loss4 = jax.block_until_ready(ovabce_loss(logits2, inds2, tile_n=16, tile_c=128))
    assert jnp.allclose(loss4, ref2, atol=1e-5, rtol=1e-5), (loss4, ref2)

    print("KERNEL_OK")
</pallas_src>

<mosaic_0001>
module attributes {stable_mosaic.version = 11 : i64} {
  func.func @_ovabce_kernel(%arg0: i32, %arg1: i32, %arg2: memref<24x128xf32, #tpu.memory_space<vmem>>, %arg3: memref<24x2xi32, #tpu.memory_space<vmem>>, %arg4: memref<1x128xf32, #tpu.memory_space<vmem>>) attributes {dimension_semantics = [#tpu.dimension_semantics<parallel>, #tpu.dimension_semantics<parallel>], iteration_bounds = array<i64: 1, 1>, scalar_prefetch = 0 : i64, scratch_operands = 0 : i64, tpu.core_type = #tpu.core_type<tc>, window_params = [{transform_indices = @transform_0, window_bounds = array<i64: 24, 128>}, {transform_indices = @transform_1, window_bounds = array<i64: 24, 2>}, {transform_indices = @transform_2, window_bounds = array<i64: 1, 128>}]} {
    %c0 = arith.constant 0 : index
    %c0_0 = arith.constant 0 : index
    %0 = vector.load %arg2[%c0, %c0_0] : memref<24x128xf32, #tpu.memory_space<vmem>>, vector<24x128xf32>
    %c0_1 = arith.constant 0 : index
    %c0_2 = arith.constant 0 : index
    %1 = vector.load %arg3[%c0_1, %c0_2] : memref<24x2xi32, #tpu.memory_space<vmem>>, vector<24x2xi32>
    %c128_i32 = arith.constant 128 : i32
    %2 = arith.muli %arg1, %c128_i32 : i32
    %3 = vector.broadcast %2 : i32 to vector<24x2xi32>
    %4 = arith.subi %1, %3 : vector<24x2xi32>
    %5 = tpu.iota {dimensions = array<i32: 1>} : vector<24x128xi32>
    %6 = vector.extract_strided_slice %4 {offsets = [0, 0], sizes = [24, 1], strides = [1, 1]} : vector<24x2xi32> to vector<24x1xi32>
    %7 = vector.broadcast %6 : vector<24x1xi32> to vector<24x128xi32>
    %8 = arith.cmpi eq, %5, %7 : vector<24x128xi32>
    %9 = vector.extract_strided_slice %4 {offsets = [0, 1], sizes = [24, 1], strides = [1, 1]} : vector<24x2xi32> to vector<24x1xi32>
    %10 = vector.broadcast %9 : vector<24x1xi32> to vector<24x128xi32>
    %11 = arith.cmpi eq, %5, %10 : vector<24x128xi32>
    %12 = arith.ori %8, %11 : vector<24x128xi1>
    %cst = arith.constant 0.000000e+00 : f32
    %13 = vector.broadcast %cst : f32 to vector<24x128xf32>
    %14 = arith.maximumf %0, %13 : vector<24x128xf32>
    %15 = math.absf %0 : vector<24x128xf32>
    %cst_3 = arith.constant 0.000000e+00 : f32
    %16 = vector.broadcast %cst_3 : f32 to vector<24x128xf32>
    %17 = arith.subf %16, %15 : vector<24x128xf32>
    %18 = math.exp %17 : vector<24x128xf32>
    %19 = math.log1p %18 : vector<24x128xf32>
    %20 = arith.addf %14, %19 : vector<24x128xf32>
    %cst_4 = arith.constant 0.000000e+00 : f32
    %21 = vector.broadcast %cst_4 : f32 to vector<24x128xf32>
    %22 = arith.select %12, %0, %21 : vector<24x128xi1>, vector<24x128xf32>
    %23 = arith.subf %20, %22 : vector<24x128xf32>
    %cst_5 = arith.constant dense<0.000000e+00> : vector<128xf32>
    %24 = vector.multi_reduction <add>, %23, %cst_5 [0] : vector<24x128xf32> to vector<128xf32>
    %25 = vector.shape_cast %24 : vector<128xf32> to vector<1x128xf32>
    %c0_6 = arith.constant 0 : index
    %c0_7 = arith.constant 0 : index
    %26 = vector.load %arg4[%c0_6, %c0_7] : memref<1x128xf32, #tpu.memory_space<vmem>>, vector<1x128xf32>
    tpu.vector_store %arg4[%c0_6, %c0_7], %25 {strides = array<i32>} : memref<1x128xf32, #tpu.memory_space<vmem>>, vector<1x128xf32>,
    return
  }
  func.func @transform_0(%arg0: i32, %arg1: i32) -> (i32, i32) {
    %c0_i32 = arith.constant 0 : i32
    return %arg0, %arg1 : i32, i32
  }
  func.func @transform_1(%arg0: i32, %arg1: i32) -> (i32, i32) {
    %c0_i32 = arith.constant 0 : i32
    %c0_i32_0 = arith.constant 0 : i32
    return %arg0, %c0_i32 : i32, i32
  }
  func.func @transform_2(%arg0: i32, %arg1: i32) -> (i32, i32) {
    %c0_i32 = arith.constant 0 : i32
    return %arg0, %arg1 : i32, i32
  }
}

</mosaic_0001>

<llo_original>
// kernel: tpu_custom_call.1
$region0: #{tpu_custom_call.1}
  #allocation0 [shape = 'u32[]', space=smem, size = 0x4, offset = 0x4, fixed_abs, tag = 'smem constant byte address 0x4 - core index']
  #allocation1 [shape = 'u32[144,128]{1,0:T(1,128)}', space=vmem, size = 0x12000, scoped, tag = 'internal scratch']
  %s0 = inlined_call_operand.vmem [shape: f32[24,128], index: 0, kind: input, shape index: {}]
  %s1 = inlined_call_operand.vmem [shape: s32[24,2], index: 1, kind: input, shape index: {}]
  %s2 = inlined_call_operand.hbm [shape: f32[1,128], index: 2, kind: output, shape index: {}]
  %s3 = sld [smem:[#allocation0]]
  $region18: #{tpu_custom_call.1} parent=0
    _
  %s5 = ssub.s32 1, %s3
  %s6 = scalar_select 0, %s5, %s3
  $region1: #{tpu_custom_call.1} parent=0
    #allocation2 [shape = 'u8[512]{0}', space=vmem, size = 0x400, scoped, tag = 'output window, operand 0, single buffered']
    #allocation3 [shape = 's32[1]{0}', space=sflag, size = 0x4, scoped, tag = 'scoped memory for tpu_custom_call.1']
    %7 = vsyncpa [#allocation3], 0
    // Predicated region
    $region2: #{tpu_custom_call.1} parent=1 // pred_check
      _
    $region3: #{tpu_custom_call.1} parent=1 // pred_check_branch
      %9 = sbr.rel (0) target = $region5
    $region4: #{tpu_custom_call.1} parent=1 // pred_region
      _
    $region5: #{tpu_custom_call.1} parent=1 // pred_fallthru
      _
    // Predicated region
    $region6: #{tpu_custom_call.1} parent=1 // pred_check
      _
    $region7: #{tpu_custom_call.1} parent=1 // pred_check_branch
      %11 = sbr.rel (0) target = $region9
    $region8: #{tpu_custom_call.1} parent=1 // pred_region
      _
    $region9: #{tpu_custom_call.1} parent=1 // pred_fallthru
      _
    %v12 = vld [vmem:[%s0] sm:$0xff]
    %v13 = vld [vmem:[%s0 + $0x8] sm:$0xff]
    %v14 = vld [vmem:[%s0 + $0x10] sm:$0xff]
    %v15 = vld [vmem:[%s1] sm:$0xff]
    %v16 = vld [vmem:[%s1 + $0x8] sm:$0xff]
    %v17 = vld [vmem:[%s1 + $0x10] sm:$0xff]
    %s18 = smul.u32 0, 128
    %v19 = vstv %s18
    %v20 = vsub.s32 %v15, %v19
    %v21 = vsub.s32 %v16, %v19
    %v22 = vsub.s32 %v17, %v19
    %v23 = vlaneseq
    %v24 = vand.u32 %v23, 127
    %25 = vset.pattern.permute.xlu0 0
    %26 = vperm.xlu0 %25, %v20
    %v27 = vpop.permute.xlu0 %26
    %28 = vset.pattern.permute.xlu0 0
    %29 = vperm.xlu0 %28, %v21
    %v30 = vpop.permute.xlu0 %29
    %31 = vset.pattern.permute.xlu0 0
    %32 = vperm.xlu0 %31, %v22
    %v33 = vpop.permute.xlu0 %32
    %vm34 = vcmp.eq.s32.totalorder %v24, %v27
    %vm35 = vcmp.eq.s32.totalorder %v24, %v30
    %vm36 = vcmp.eq.s32.totalorder %v24, %v33
    %37 = vset.pattern.permute.xlu0 1
    %38 = vperm.xlu0 %37, %v20
    %v39 = vpop.permute.xlu0 %38
    %40 = vset.pattern.permute.xlu0 1
    %41 = vperm.xlu0 %40, %v21
    %v42 = vpop.permute.xlu0 %41
    %43 = vset.pattern.permute.xlu0 1
    %44 = vperm.xlu0 %43, %v22
    %v45 = vpop.permute.xlu0 %44
    %vm46 = vcmp.eq.s32.totalorder %v24, %v39
    %vm47 = vcmp.eq.s32.totalorder %v24, %v42
    %vm48 = vcmp.eq.s32.totalorder %v24, %v45
    %vm49 = vmor %vm34, %vm46
    %vm50 = vmor %vm35, %vm47
    %vm51 = vmor %vm36, %vm48
    %v52 = vmax.f32 %v12, 0.0
    %v53 = vmax.f32 %v13, 0.0
    %v54 = vmax.f32 %v14, 0.0
    %v55 = vand.u32 2147483647, %v12
    %v56 = vand.u32 2147483647, %v13
    %v57 = vand.u32 2147483647, %v14
    %v58 = vsub.f32 0.0, %v55
    %v59 = vsub.f32 0.0, %v56
    %v60 = vsub.f32 0.0, %v57
    %v61 = vmul.f32 %v58, 1.442695
    %v62 = vpow.pop %v61
    %v63 = vmul.f32 %v59, 1.442695
    %v64 = vpow.pop %v63
    %v65 = vmul.f32 %v60, 1.442695
    %v66 = vpow.pop %v65
    %v67 = vadd.f32 %v62, 1.0
    %v68 = vlog2.pop %v67
    %v69 = vmul.f32 %v68, 0.6931472
    %v70 = vmul.f32 -0.5, %v62
    %v71 = vadd.f32 %v70, 1.0
    %v72 = vmul.f32 %v71, %v62
    %v73 = vand.u32 2147483647, %v62
    %vm74 = vcmp.lt.f32.partialorder %v73, 0.0004427343
    %v75 = vsel %vm74, %v72, %v69
    %v76 = vadd.f32 %v64, 1.0
    %v77 = vlog2.pop %v76
    %v78 = vmul.f32 %v77, 0.6931472
    %v79 = vmul.f32 -0.5, %v64
    %v80 = vadd.f32 %v79, 1.0
    %v81 = vmul.f32 %v80, %v64
    %v82 = vand.u32 2147483647, %v64
    %vm83 = vcmp.lt.f32.partialorder %v82, 0.0004427343
    %v84 = vsel %vm83, %v81, %v78
    %v85 = vadd.f32 %v66, 1.0
    %v86 = vlog2.pop %v85
    %v87 = vmul.f32 %v86, 0.6931472
    %v88 = vmul.f32 -0.5, %v66
    %v89 = vadd.f32 %v88, 1.0
    %v90 = vmul.f32 %v89, %v66
    %v91 = vand.u32 2147483647, %v66
    %vm92 = vcmp.lt.f32.partialorder %v91, 0.0004427343
    %v93 = vsel %vm92, %v90, %v87
    %v94 = vadd.f32 %v52, %v75
    %v95 = vadd.f32 %v53, %v84
    %v96 = vadd.f32 %v54, %v93
    %v97 = vsel %vm49, %v12, 0.0
    %v98 = vsel %vm50, %v13, 0.0
    %v99 = vsel %vm51, %v14, 0.0
    %v100 = vsub.f32 %v94, %v97
    %v101 = vsub.f32 %v95, %v98
    %v102 = vsub.f32 %v96, %v99
    %v103 = vadd.f32 %v100, %v101
    %v104 = vadd.f32 %v103, %v102
    %v105 = vrot.slane %v104, 4
    %v106 = vadd.f32 %v104, %v105
    %v107 = vrot.slane %v106, 2
    %v108 = vadd.f32 %v106, %v107
    %v109 = vrot.slane %v108, 1
    %v110 = vadd.f32 %v108, %v109
    %111 = vst [vmem:[#allocation2] sm:$0x1] %v110
    // Predicated region
    $region10: #{tpu_custom_call.1} parent=1 // pred_check
      _
    $region11: #{tpu_custom_call.1} parent=1 // pred_check_branch
      %113 = sbr.rel (0) target = $region13
    $region12: #{tpu_custom_call.1} parent=1 // pred_region
      %s115 = ssub.s32 16, 16
      %116 = vsyncadd [#allocation3], %s115
      %s118 = sshll.u32 [#allocation2], 4
      %s119 = int_to_ptr.vmem [resolvable:$true] %s118
      %121 = dma.vmem_to_hbm [thread:$0]  %s119, 16, %s2, [#allocation3]
    $region13: #{tpu_custom_call.1} parent=1 // pred_fallthru
      _
    // Predicated region
    $region14: #{tpu_custom_call.1} parent=1 // pred_check
      _
    $region15: #{tpu_custom_call.1} parent=1 // pred_check_branch
      %123 = sbr.rel (0) target = $region17
    $region16: #{tpu_custom_call.1} parent=1 // pred_region
      %124 = dma.done [#allocation3], 16
    $region17: #{tpu_custom_call.1} parent=1 // pred_fallthru
      _
    %125 = vsyncpa [#allocation3], 1

</llo_original>
